<compile_context>
chip_gen: v6e
topology: v6e:2x2x1
jax: 0.10.0
libtpu: 0.0.40
codegen_flags: <defaults>
</compile_context>

<pallas_src>
import functools
import math

import jax
import jax.numpy as jnp
from jax.experimental import pallas as pl
from jax.experimental.pallas import tpu as pltpu

_VMEM_LIMIT = 32 * 1024 * 1024
_EPS = 1e-5

_TM = 256        # matmul row tile
_TK = 1152       # matmul K tile (9*128; divides 9*256 and 9*512)
_TN_LN = 256     # layernorm row tile
_TN_QKV = 128    # fused qkv-projection row tile


def _round_up(x, m):
    return ((x + m - 1) // m) * m


# --------------------------------------------------------------------------
# Pallas kernels
# --------------------------------------------------------------------------
def _apply_act(x, act):
    if act == "relu":
        return jnp.maximum(x, 0.0)
    if act == "sigmoid":
        return jax.nn.sigmoid(x)
    return x


def _mm_kernel(a_ref, w_ref, b_ref, o_ref, *, act):
    # bf16 operands -> fp32 accumulation on the MXU.
    acc = jnp.dot(a_ref[...], w_ref[...], preferred_element_type=jnp.float32)
    o_ref[...] = _apply_act(acc + b_ref[...], act)


def _mm_res_kernel(a_ref, w_ref, b_ref, r_ref, o_ref, *, act):
    acc = jnp.dot(a_ref[...], w_ref[...], preferred_element_type=jnp.float32)
    o_ref[...] = _apply_act(acc + b_ref[...], act) + r_ref[...]


def _mm_ktiled_kernel(a_ref, w_ref, b_ref, o_ref, acc_ref, *, act):
    @pl.when(pl.program_id(1) == 0)
    def _():
        acc_ref[...] = jnp.zeros_like(acc_ref)

    acc_ref[...] += jnp.dot(a_ref[...], w_ref[...],
                            preferred_element_type=jnp.float32)

    @pl.when(pl.program_id(1) == pl.num_programs(1) - 1)
    def _():
        o_ref[...] = _apply_act(acc_ref[...] + b_ref[...], act)


def _mm_res_ktiled_kernel(a_ref, w_ref, b_ref, r_ref, o_ref, acc_ref, *, act):
    @pl.when(pl.program_id(1) == 0)
    def _():
        acc_ref[...] = jnp.zeros_like(acc_ref)

    acc_ref[...] += jnp.dot(a_ref[...], w_ref[...],
                            preferred_element_type=jnp.float32)

    @pl.when(pl.program_id(1) == pl.num_programs(1) - 1)
    def _():
        o_ref[...] = _apply_act(acc_ref[...] + b_ref[...], act) + r_ref[...]


_ACTS = ("none", "relu", "sigmoid")
_MM_KERNELS = {a: functools.partial(_mm_kernel, act=a) for a in _ACTS}
_MM_K_KERNELS = {a: functools.partial(_mm_ktiled_kernel, act=a) for a in _ACTS}
_MM_RES_KERNELS = {a: functools.partial(_mm_res_kernel, act=a) for a in _ACTS}
_MM_RES_K_KERNELS = {a: functools.partial(_mm_res_ktiled_kernel, act=a)
                     for a in _ACTS}


@functools.partial(jax.jit, static_argnames=("act",))
def matmul_bias_act(a, w, b, res=None, act="none"):
    """(M,K) @ (K,N) + b, fused activation, optional fused residual add.

    bf16 operands in, fp32 accumulate / out."""
    M, K = a.shape
    K2, N = w.shape
    assert K == K2
    a = a.astype(jnp.bfloat16)
    w = w.astype(jnp.bfloat16)
    b2 = b.reshape(1, N).astype(jnp.float32)
    has_res = res is not None
    if has_res:
        res = res.astype(jnp.float32)

    # Robust M tiling: tile to 256 rows, zero-pad to a multiple, slice after.
    if M > _TM:
        tm = _TM
        Mp = _round_up(M, tm)
        if Mp != M:
            a = jnp.pad(a, ((0, Mp - M), (0, 0)))
            if has_res:
                res = jnp.pad(res, ((0, Mp - M), (0, 0)))
    else:
        tm, Mp = M, M
    gm = Mp // tm

    if K > _TK:
        # K-tiled path with fp32 VMEM accumulator (K axis last, "arbitrary").
        tk = _TK
        Kp = _round_up(K, tk)
        if Kp != K:
            a = jnp.pad(a, ((0, 0), (0, Kp - K)))
            w = jnp.pad(w, ((0, Kp - K), (0, 0)))
        gk = Kp // tk
        in_specs = [
            pl.BlockSpec((tm, tk), lambda i, k: (i, k)),
            pl.BlockSpec((tk, N), lambda i, k: (k, 0)),
            pl.BlockSpec((1, N), lambda i, k: (0, 0)),
        ]
        args = [a, w, b2]
        if has_res:
            in_specs.append(pl.BlockSpec((tm, N), lambda i, k: (i, 0)))
            args.append(res)
        kern = (_MM_RES_K_KERNELS if has_res else _MM_K_KERNELS)[act]
        out = pl.pallas_call(
            kern,
            out_shape=jax.ShapeDtypeStruct((Mp, N), jnp.float32),
            grid=(gm, gk),
            in_specs=in_specs,
            out_specs=pl.BlockSpec((tm, N), lambda i, k: (i, 0)),
            scratch_shapes=[pltpu.VMEM((tm, N), jnp.float32)],
            compiler_params=pltpu.CompilerParams(
                dimension_semantics=("parallel", "arbitrary"),
                vmem_limit_bytes=_VMEM_LIMIT),
        )(*args)
    else:
        in_specs = [
            pl.BlockSpec((tm, K), lambda i: (i, 0)),
            pl.BlockSpec((K, N), lambda i: (0, 0)),
            pl.BlockSpec((1, N), lambda i: (0, 0)),
        ]
        args = [a, w, b2]
        if has_res:
            in_specs.append(pl.BlockSpec((tm, N), lambda i: (i, 0)))
            args.append(res)
        kern = (_MM_RES_KERNELS if has_res else _MM_KERNELS)[act]
        out = pl.pallas_call(
            kern,
            out_shape=jax.ShapeDtypeStruct((Mp, N), jnp.float32),
            grid=(gm,),
            in_specs=in_specs,
            out_specs=pl.BlockSpec((tm, N), lambda i: (i, 0)),
            compiler_params=pltpu.CompilerParams(
                dimension_semantics=("parallel",),
                vmem_limit_bytes=_VMEM_LIMIT),
        )(*args)
    return out[:M] if Mp != M else out


def _layernorm_kernel(x_ref, g_ref, b_ref, o_ref):
    x = x_ref[...].astype(jnp.float32)
    mu = jnp.mean(x, axis=-1, keepdims=True)
    xc = x - mu
    var = jnp.mean(xc * xc, axis=-1, keepdims=True)
    inv = jax.lax.rsqrt(var + _EPS)
    o_ref[...] = xc * inv * g_ref[...] + b_ref[...]


@jax.jit
def layernorm2d(x2d, gamma, beta):
    """LayerNorm over the last axis of (N, D), row-tiled / pipelined."""
    N, D = x2d.shape
    if N > _TN_LN:
        tn = _TN_LN
        Np = _round_up(N, tn)
        if Np != N:
            x2d = jnp.pad(x2d, ((0, Np - N), (0, 0)))
    else:
        tn, Np = N, N
    out = pl.pallas_call(
        _layernorm_kernel,
        out_shape=jax.ShapeDtypeStruct((Np, D), jnp.float32),
        grid=(Np // tn,),
        in_specs=[
            pl.BlockSpec((tn, D), lambda i: (i, 0)),
            pl.BlockSpec((1, D), lambda i: (0, 0)),
            pl.BlockSpec((1, D), lambda i: (0, 0)),
        ],
        out_specs=pl.BlockSpec((tn, D), lambda i: (i, 0)),
        compiler_params=pltpu.CompilerParams(
            dimension_semantics=("parallel",),
            vmem_limit_bytes=_VMEM_LIMIT),
    )(x2d, gamma.reshape(1, D), beta.reshape(1, D))
    return out[:N] if Np != N else out


def _qkv_proj_kernel(p_ref, dww_ref, dwb_ref, g_ref, bb_ref, lw_ref, lb_ref,
                     q_ref, k_ref, v_ref):
    """Fused per-pixel ConvAttention projections for Q, K, V.

    p_ref:   (tn, 9, C) bf16 patch taps (read ONCE, reused for q/k/v)
    dww_ref: (3, 9, C) fp32 depthwise weights
    dwb/g/bb/lb: (3, 1, C) fp32 biases / LN affine / linear bias
    lw_ref:  (3, C, C) bf16 MHA in-projection weights
    outputs: three (tn, C) fp32 (projected q, k, v)
    """
    p = p_ref[...]                         # (tn, 9, C) bf16
    out_refs = (q_ref, k_ref, v_ref)
    for j in range(3):
        w = dww_ref[j]                     # (9, C) fp32
        acc = p[:, 0, :].astype(jnp.float32) * w[0]
        for t in range(1, 9):
            acc = acc + p[:, t, :].astype(jnp.float32) * w[t]
        y = jnp.maximum(acc + dwb_ref[j], 0.0)
        # Channel LayerNorm (fp32 statistics).
        mu = jnp.mean(y, axis=-1, keepdims=True)
        yc = y - mu
        var = jnp.mean(yc * yc, axis=-1, keepdims=True)
        inv = jax.lax.rsqrt(var + _EPS)
        y = yc * inv * g_ref[j] + bb_ref[j]
        # MHA input projection on the MXU (bf16 operands, fp32 accumulate).
        out_refs[j][...] = jnp.dot(y.astype(jnp.bfloat16), lw_ref[j],
                                   preferred_element_type=jnp.float32) + lb_ref[j]


@jax.jit
def dwconv_qkv_proj(x, dw_w, dw_b, ln_g, ln_b, lin_w, lin_b):
    """Depthwise 3x3 'same' conv + ReLU + channel LN + linear, for Q/K/V.

    x: (B,H,W,C); dw_w: (3,9,C); dw_b/ln_g/ln_b/lin_b: (3,C); lin_w: (3,C,C).
    Returns (q, k, v), each (B*H*W, C) fp32."""
    B, H, W, C = x.shape
    N = B * H * W
    p = _im2col_patches(x.astype(jnp.bfloat16), 1).reshape(N, 9, C)
    if N > _TN_QKV:
        tn = _TN_QKV
        Np = _round_up(N, tn)
        if Np != N:
            p = jnp.pad(p, ((0, Np - N), (0, 0), (0, 0)))
    else:
        tn, Np = N, N

    dw_w = dw_w.astype(jnp.float32)
    dw_b3 = dw_b.reshape(3, 1, C).astype(jnp.float32)
    ln_g3 = ln_g.reshape(3, 1, C).astype(jnp.float32)
    ln_b3 = ln_b.reshape(3, 1, C).astype(jnp.float32)
    lin_b3 = lin_b.reshape(3, 1, C).astype(jnp.float32)
    lin_w = lin_w.astype(jnp.bfloat16)

    row_spec = pl.BlockSpec((tn, C), lambda i: (i, 0))
    vec_spec = pl.BlockSpec((3, 1, C), lambda i: (0, 0, 0))
    q, k, v = pl.pallas_call(
        _qkv_proj_kernel,
        out_shape=tuple(jax.ShapeDtypeStruct((Np, C), jnp.float32)
                        for _ in range(3)),
        grid=(Np // tn,),
        in_specs=[
            pl.BlockSpec((tn, 9, C), lambda i: (i, 0, 0)),
            pl.BlockSpec((3, 9, C), lambda i: (0, 0, 0)),
            vec_spec, vec_spec, vec_spec,
            pl.BlockSpec((3, C, C), lambda i: (0, 0, 0)),
            vec_spec,
        ],
        out_specs=(row_spec, row_spec, row_spec),
        compiler_params=pltpu.CompilerParams(
            dimension_semantics=("parallel",),
            vmem_limit_bytes=_VMEM_LIMIT),
    )(p, dw_w, dw_b3, ln_g3, ln_b3, lin_w, lin_b3)
    if Np != N:
        q, k, v = q[:N], k[:N], v[:N]
    return q, k, v


def _attn_kernel(q_ref, k_ref, v_ref, o_ref, *, scale):
    # Blocks are (heads, S, Dh): all heads of one batch element per grid step.
    q = q_ref[...].astype(jnp.bfloat16)
    k = k_ref[...].astype(jnp.bfloat16)
    v = v_ref[...].astype(jnp.bfloat16)
    # Contract on Dh directly (no materialized K^T), batched over heads.
    s = jnp.einsum("hqd,hkd->hqk", q, k,
                   preferred_element_type=jnp.float32) * scale
    m = jnp.max(s, axis=-1, keepdims=True)
    p = jnp.exp(s - m)
    l = jnp.sum(p, axis=-1, keepdims=True)
    o = jnp.einsum("hqk,hkd->hqd", p.astype(jnp.bfloat16), v,
                   preferred_element_type=jnp.float32)
    o_ref[...] = o * pl.reciprocal(l, approx=True)


@functools.partial(jax.jit, static_argnames=("num_heads",))
def mha_core(q, k, v, num_heads):
    """softmax(QK^T/sqrt(Dh)) V, all heads of a batch element per grid step."""
    B, S, C = q.shape
    Dh = C // num_heads
    scale = 1.0 / math.sqrt(Dh)

    def split(x):
        return x.reshape(B, S, num_heads, Dh).transpose(0, 2, 1, 3)

    qh, kh, vh = split(q), split(k), split(v)      # (B, H, S, Dh)
    spec = pl.BlockSpec((None, num_heads, S, Dh), lambda b: (b, 0, 0, 0))
    out = pl.pallas_call(
        functools.partial(_attn_kernel, scale=scale),
        out_shape=jax.ShapeDtypeStruct((B, num_heads, S, Dh), jnp.float32),
        grid=(B,),
        in_specs=[spec, spec, spec],
        out_specs=spec,
        compiler_params=pltpu.CompilerParams(
            dimension_semantics=("parallel",),
            vmem_limit_bytes=_VMEM_LIMIT),
    )(qh, kh, vh)
    return out.transpose(0, 2, 1, 3).reshape(B, S, C)


# --------------------------------------------------------------------------
# JAX glue (reshapes, im2col, pooling, upsampling, exact GELU)
# --------------------------------------------------------------------------
def _im2col_patches(x, d):
    """3x3 'same' patches with dilation d. x: (B,H,W,C) -> (B,H,W,9,C)."""
    B, H, W, C = x.shape
    xp = jnp.pad(x, ((0, 0), (d, d), (d, d), (0, 0)))
    taps = []
    for ki in range(3):
        for kj in range(3):
            taps.append(xp[:, ki * d:ki * d + H, kj * d:kj * d + W, :])
    return jnp.stack(taps, axis=3)


def conv3x3(x, w, b, dilation=1, act="none", residual=None):
    """Dense 3x3 'same' conv via bf16 im2col + Pallas matmul. w: (9*Cin, Cout).
    # TODO(synk): fuse patch construction (halo loads) into the matmul kernel
    # to remove the remaining im2col HBM inflation."""
    B, H, W, C = x.shape
    p = _im2col_patches(x.astype(jnp.bfloat16), dilation).reshape(B * H * W, 9 * C)
    r = None if residual is None else residual.reshape(B * H * W, -1)
    out = matmul_bias_act(p, w, b, r, act=act)
    return out.reshape(B, H, W, -1)


def gelu(x):
    # TODO(synk): exact-erf GELU kept in JAX glue (erf lowering in Mosaic not guaranteed).
    return jax.nn.gelu(x, approximate=False)


def avgpool2(x):
    B, H, W, C = x.shape
    return x.reshape(B, H // 2, 2, W // 2, 2, C).mean(axis=(2, 4))


def maxpool2(x):
    B, H, W, C = x.shape
    return x.reshape(B, H // 2, 2, W // 2, 2, C).max(axis=(2, 4))


def upsample2(x):
    return jnp.repeat(jnp.repeat(x, 2, axis=1), 2, axis=2)


def layernorm_full(x, p):
    """nn.LayerNorm([C,H,W]) equivalent (normalize over all C*H*W per sample)."""
    B, H, W, C = x.shape
    return layernorm2d(x.reshape(B, H * W * C), p["g"], p["b"]).reshape(B, H, W, C)


# --------------------------------------------------------------------------
# Deterministic parameter init
# --------------------------------------------------------------------------
_key_holder = [jax.random.PRNGKey(42)]


def _nxt():
    _key_holder[0], k = jax.random.split(_key_holder[0])
    return k


def _uni(shape, bound):
    return jax.random.uniform(_nxt(), shape, jnp.float32, -bound, bound)


def ln_params(D):
    return {"g": jnp.ones((D,), jnp.float32), "b": jnp.zeros((D,), jnp.float32)}


def dense_conv_params(cin, cout):
    bound = 1.0 / math.sqrt(9 * cin)
    return {"w": _uni((9 * cin, cout), bound), "b": _uni((cout,), bound)}


def dw_conv_params(c):
    bound = 1.0 / math.sqrt(9)
    return {"w": _uni((9, c), bound), "b": _uni((c,), bound)}


def linear_params(cin, cout):
    bound = 1.0 / math.sqrt(cin)
    return {"w": _uni((cin, cout), bound), "b": _uni((cout,), bound)}


def conv1x1_params(cin, cout):
    bound = 1.0 / math.sqrt(cin)
    return {"w": _uni((cin, cout), bound), "b": _uni((cout,), bound)}


def conv_attention_params(C):
    return {
        "dw_q": dw_conv_params(C), "ln_q": ln_params(C),
        "dw_k": dw_conv_params(C), "ln_k": ln_params(C),
        "dw_v": dw_conv_params(C), "ln_v": ln_params(C),
        "wq": linear_params(C, C), "wk": linear_params(C, C),
        "wv": linear_params(C, C), "wo": linear_params(C, C),
    }


def transformer_params(C, img):
    return {
        "attn": conv_attention_params(C),
        "conv1": dense_conv_params(C, C),
        "ln": ln_params(C * img * img),
        "wf": {"l1": dense_conv_params(C, C), "d2": dense_conv_params(C, C),
               "d3": dense_conv_params(C, C), "l4": dense_conv_params(C, C)},
    }


def block_enc_noskip_params(cin, cout, img):
    return {"ln": ln_params(cin * img * img),
            "l1": dense_conv_params(cin, cout),
            "l2": dense_conv_params(cout, cout),
            "trans": transformer_params(cout, img // 2)}


def block_enc_skip_params(cin, cout, img):
    return {"ln": ln_params(cin * img * img),
            "l1": dense_conv_params(1, cin),
            "l2": dense_conv_params(cin * 2, cout),
            "l3": dense_conv_params(cout, cout),
            "trans": transformer_params(cout, img // 2)}


def block_dec_params(cin, cout, img):
    return {"ln": ln_params(cin * img * img),
            "l1": dense_conv_params(cin, cout),
            "l2": dense_conv_params(cout * 2, cout),
            "l3": dense_conv_params(cout, cout),
            "trans": transformer_params(cout, img * 2)}


def dsout_params(cin, cout, img):
    return {"ln": ln_params(cin * (2 * img) * (2 * img)),
            "c1": dense_conv_params(cin, cin),
            "c2": dense_conv_params(cin, cin),
            "c3": conv1x1_params(cin, cout)}


def fct_params(img_size):
    f = [32, 64, 128, 256, 512, 256, 128, 64, 32]
    return {
        "b1": block_enc_noskip_params(1, f[0], img_size),
        "b2": block_enc_skip_params(f[0], f[1], img_size // 2),
        "b3": block_enc_skip_params(f[1], f[2], img_size // 4),
        "b4": block_enc_skip_params(f[2], f[3], img_size // 8),
        "b5": block_enc_noskip_params(f[3], f[4], img_size // 16),
        "b6": block_dec_params(f[4], f[5], img_size // 32),
        "b7": block_dec_params(f[5], f[6], img_size // 16),
        "b8": block_dec_params(f[6], f[7], img_size // 8),
        "b9": block_dec_params(f[7], f[8], img_size // 4),
        "ds7": dsout_params(f[6], 1, img_size // 8),
        "ds8": dsout_params(f[7], 1, img_size // 4),
        "ds9": dsout_params(f[8], 1, img_size // 2),
    }


# --------------------------------------------------------------------------
# Module forward passes (mirror the PyTorch modules, eval mode)
# --------------------------------------------------------------------------
def conv_attention_fwd(p, x, num_heads):
    B, H, W, C = x.shape
    S = H * W

    # All three projections (depthwise conv + ReLU + channel LN + MHA
    # in-projection) fused into one Pallas kernel — the 3x3 patches of x are
    # built once and read from HBM once.
    dw_w = jnp.stack([p["dw_q"]["w"], p["dw_k"]["w"], p["dw_v"]["w"]])
    dw_b = jnp.stack([p["dw_q"]["b"], p["dw_k"]["b"], p["dw_v"]["b"]])
    ln_g = jnp.stack([p["ln_q"]["g"], p["ln_k"]["g"], p["ln_v"]["g"]])
    ln_b = jnp.stack([p["ln_q"]["b"], p["ln_k"]["b"], p["ln_v"]["b"]])
    lin_w = jnp.stack([p["wq"]["w"], p["wk"]["w"], p["wv"]["w"]])
    lin_b = jnp.stack([p["wq"]["b"], p["wk"]["b"], p["wv"]["b"]])
    q, k, v = dwconv_qkv_proj(x, dw_w, dw_b, ln_g, ln_b, lin_w, lin_b)

    q = q.reshape(B, S, C)
    k = k.reshape(B, S, C)
    v = v.reshape(B, S, C)

    o = mha_core(q, k, v, num_heads)
    o = matmul_bias_act(o.reshape(B * S, C), p["wo"]["w"], p["wo"]["b"])
    return o.reshape(B, H, W, C)


def wide_focus_fwd(p, x):
    # TODO(synk): fuse the three branch convs (shared input tile, 3 weight
    # sets) into one Pallas call to cut input HBM traffic ~3x.
    x1 = gelu(conv3x3(x, p["l1"]["w"], p["l1"]["b"], dilation=1))
    x2 = gelu(conv3x3(x, p["d2"]["w"], p["d2"]["b"], dilation=2))
    x3 = gelu(conv3x3(x, p["d3"]["w"], p["d3"]["b"], dilation=3))
    added = x1 + x2 + x3
    return gelu(conv3x3(added, p["l4"]["w"], p["l4"]["b"], dilation=1))


def transformer_fwd(p, x, num_heads):
    x1 = conv_attention_fwd(p["attn"], x, num_heads)
    # StochasticDepth -> identity (eval mode); residual add fused into the
    # conv1 matmul epilogue.
    x2 = conv3x3(x1, p["conv1"]["w"], p["conv1"]["b"], residual=x)
    x3 = layernorm_full(x2, p["ln"])
    x3 = wide_focus_fwd(p["wf"], x3)
    return x3 + x2


def block_enc_noskip_fwd(p, x, num_heads):
    x = layernorm_full(x, p["ln"])
    x1 = conv3x3(x, p["l1"]["w"], p["l1"]["b"], act="relu")
    x1 = conv3x3(x1, p["l2"]["w"], p["l2"]["b"], act="relu")
    x1 = maxpool2(x1)
    return transformer_fwd(p["trans"], x1, num_heads)


def block_enc_skip_fwd(p, x, scale_img, num_heads):
    x1 = layernorm_full(x, p["ln"])
    s1 = conv3x3(scale_img, p["l1"]["w"], p["l1"]["b"], act="relu")
    x1 = jnp.concatenate([s1, x1], axis=-1)
    x1 = conv3x3(x1, p["l2"]["w"], p["l2"]["b"], act="relu")
    x1 = conv3x3(x1, p["l3"]["w"], p["l3"]["b"], act="relu")
    x1 = maxpool2(x1)
    return transformer_fwd(p["trans"], x1, num_heads)


def block_dec_fwd(p, x, skip, num_heads):
    x1 = layernorm_full(x, p["ln"])
    x1 = upsample2(x1)
    x1 = conv3x3(x1, p["l1"]["w"], p["l1"]["b"], act="relu")
    x1 = jnp.concatenate([skip, x1], axis=-1)
    x1 = conv3x3(x1, p["l2"]["w"], p["l2"]["b"], act="relu")
    x1 = conv3x3(x1, p["l3"]["w"], p["l3"]["b"], act="relu")
    return transformer_fwd(p["trans"], x1, num_heads)


def dsout_fwd(p, x):
    x1 = upsample2(x)
    x1 = layernorm_full(x1, p["ln"])
    x1 = conv3x3(x1, p["c1"]["w"], p["c1"]["b"], act="relu")
    x1 = conv3x3(x1, p["c2"]["w"], p["c2"]["b"], act="relu")
    B, H, W, C = x1.shape
    # 1x1 conv to a single output channel + sigmoid: N=1 is lane-sparse
    # (masked vst, 99% lane waste) -> done in plain XLA.
    out = jax.nn.sigmoid(x1.reshape(B * H * W, C) @ p["c3"]["w"] + p["c3"]["b"])
    return out.reshape(B, H, W, 1)


def fct_forward(params, x_nchw):
    heads = [2, 4, 8, 16, 32, 16, 8, 4, 2]
    x = jnp.transpose(x_nchw, (0, 2, 3, 1))  # NCHW -> NHWC
    s2 = avgpool2(x)
    s3 = avgpool2(s2)
    s4 = avgpool2(s3)

    x1 = block_enc_noskip_fwd(params["b1"], x, heads[0]); skip1 = x1
    x1 = block_enc_skip_fwd(params["b2"], x1, s2, heads[1]); skip2 = x1
    x1 = block_enc_skip_fwd(params["b3"], x1, s3, heads[2]); skip3 = x1
    x1 = block_enc_skip_fwd(params["b4"], x1, s4, heads[3]); skip4 = x1
    x1 = block_enc_noskip_fwd(params["b5"], x1, heads[4])
    x1 = block_dec_fwd(params["b6"], x1, skip4, heads[5])
    x1 = block_dec_fwd(params["b7"], x1, skip3, heads[6]); skip7 = x1
    x1 = block_dec_fwd(params["b8"], x1, skip2, heads[7]); skip8 = x1
    x1 = block_dec_fwd(params["b9"], x1, skip1, heads[8]); skip9 = x1

    out7 = dsout_fwd(params["ds7"], skip7)
    out8 = dsout_fwd(params["ds8"], skip8)
    out9 = dsout_fwd(params["ds9"], skip9)
    # Return in NCHW like the PyTorch module
    to_nchw = lambda o: jnp.transpose(o, (0, 3, 1, 2))
    return to_nchw(out7), to_nchw(out8), to_nchw(out9)


# Single top-level jit: the whole forward (kernels + glue) becomes one XLA
# program, removing per-op host dispatch overhead at these small shapes.
fct_forward_jit = jax.jit(fct_forward)


# --------------------------------------------------------------------------
if __name__ == "__main__":
    IMG = 32   # must be divisible by 32 (block_6 works at img_size // 32)
    B = 2

    params = fct_params(IMG)
    x = jax.random.normal(jax.random.PRNGKey(0), (B, 1, IMG, IMG), jnp.float32)

    out7, out8, out9 = fct_forward_jit(params, x)
    jax.block_until_ready((out7, out8, out9))

    assert out7.shape == (B, 1, IMG // 4, IMG // 4)
    assert out8.shape == (B, 1, IMG // 2, IMG // 2)
    assert out9.shape == (B, 1, IMG, IMG)
    assert jnp.all(jnp.isfinite(out7))
    assert jnp.all(jnp.isfinite(out8))
    assert jnp.all(jnp.isfinite(out9))

    print("KERNEL_OK")
</pallas_src>

<mosaic_0001>
module attributes {stable_mosaic.version = 11 : i64} {
  func.func @_layernorm_kernel(%arg0: i32, %arg1: memref<2x1024xf32, #tpu.memory_space<vmem>>, %arg2: memref<1x1024xf32, #tpu.memory_space<vmem>>, %arg3: memref<1x1024xf32, #tpu.memory_space<vmem>>, %arg4: memref<2x1024xf32, #tpu.memory_space<vmem>>) attributes {dimension_semantics = [#tpu.dimension_semantics<parallel>], iteration_bounds = array<i64: 1>, scalar_prefetch = 0 : i64, scratch_operands = 0 : i64, tpu.core_type = #tpu.core_type<tc>, window_params = [{transform_indices = @transform_0, window_bounds = array<i64: 2, 1024>}, {pipeline_mode = #tpu.pipeline_mode<synchronous>, transform_indices = @transform_1, window_bounds = array<i64: 1, 1024>}, {pipeline_mode = #tpu.pipeline_mode<synchronous>, transform_indices = @transform_2, window_bounds = array<i64: 1, 1024>}, {transform_indices = @transform_3, window_bounds = array<i64: 2, 1024>}]} {
    %c0 = arith.constant 0 : index
    %c0_0 = arith.constant 0 : index
    %0 = vector.load %arg1[%c0, %c0_0] : memref<2x1024xf32, #tpu.memory_space<vmem>>, vector<2x1024xf32>
    %cst = arith.constant dense<0.000000e+00> : vector<2xf32>
    %1 = vector.multi_reduction <add>, %0, %cst [1] : vector<2x1024xf32> to vector<2xf32>
    %2 = vector.shape_cast %1 : vector<2xf32> to vector<2x1xf32>
    %cst_1 = arith.constant 1.024000e+03 : f32
    %3 = vector.broadcast %cst_1 : f32 to vector<2x1xf32>
    %4 = arith.divf %2, %3 : vector<2x1xf32>
    %5 = vector.broadcast %4 : vector<2x1xf32> to vector<2x1024xf32>
    %6 = arith.subf %0, %5 : vector<2x1024xf32>
    %7 = arith.mulf %6, %6 : vector<2x1024xf32>
    %cst_2 = arith.constant dense<0.000000e+00> : vector<2xf32>
    %8 = vector.multi_reduction <add>, %7, %cst_2 [1] : vector<2x1024xf32> to vector<2xf32>
    %9 = vector.shape_cast %8 : vector<2xf32> to vector<2x1xf32>
    %cst_3 = arith.constant 1.024000e+03 : f32
    %10 = vector.broadcast %cst_3 : f32 to vector<2x1xf32>
    %11 = arith.divf %9, %10 : vector<2x1xf32>
    %cst_4 = arith.constant 9.99999974E-6 : f32
    %12 = vector.broadcast %cst_4 : f32 to vector<2x1xf32>
    %13 = arith.addf %11, %12 : vector<2x1xf32>
    %14 = math.rsqrt %13 : vector<2x1xf32>
    %15 = vector.broadcast %14 : vector<2x1xf32> to vector<2x1024xf32>
    %16 = arith.mulf %6, %15 : vector<2x1024xf32>
    %c0_5 = arith.constant 0 : index
    %c0_6 = arith.constant 0 : index
    %17 = vector.load %arg2[%c0_5, %c0_6] : memref<1x1024xf32, #tpu.memory_space<vmem>>, vector<1x1024xf32>
    %18 = vector.broadcast %17 : vector<1x1024xf32> to vector<2x1024xf32>
    %19 = arith.mulf %16, %18 : vector<2x1024xf32>
    %c0_7 = arith.constant 0 : index
    %c0_8 = arith.constant 0 : index
    %20 = vector.load %arg3[%c0_7, %c0_8] : memref<1x1024xf32, #tpu.memory_space<vmem>>, vector<1x1024xf32>
    %21 = vector.broadcast %20 : vector<1x1024xf32> to vector<2x1024xf32>
    %22 = arith.addf %19, %21 : vector<2x1024xf32>
    %c0_9 = arith.constant 0 : index
    %c0_10 = arith.constant 0 : index
    %23 = vector.load %arg4[%c0_9, %c0_10] : memref<2x1024xf32, #tpu.memory_space<vmem>>, vector<2x1024xf32>
    tpu.vector_store %arg4[%c0_9, %c0_10], %22 {strides = array<i32>} : memref<2x1024xf32, #tpu.memory_space<vmem>>, vector<2x1024xf32>,
    return
  }
  func.func @transform_0(%arg0: i32) -> (i32, i32) {
    %c0_i32 = arith.constant 0 : i32
    %c0_i32_0 = arith.constant 0 : i32
    return %arg0, %c0_i32 : i32, i32
  }
  func.func @transform_1(%arg0: i32) -> (i32, i32) {
    %c0_i32 = arith.constant 0 : i32
    %c0_i32_0 = arith.constant 0 : i32
    %c0_i32_1 = arith.constant 0 : i32
    return %c0_i32, %c0_i32_0 : i32, i32
  }
  func.func @transform_2(%arg0: i32) -> (i32, i32) {
    %c0_i32 = arith.constant 0 : i32
    %c0_i32_0 = arith.constant 0 : i32
    %c0_i32_1 = arith.constant 0 : i32
    return %c0_i32, %c0_i32_0 : i32, i32
  }
  func.func @transform_3(%arg0: i32) -> (i32, i32) {
    %c0_i32 = arith.constant 0 : i32
    %c0_i32_0 = arith.constant 0 : i32
    return %arg0, %c0_i32 : i32, i32
  }
}

</mosaic_0001>

<llo_original>
// kernel: layernorm2d.1
$region0: #{layernorm2d.1}
  #allocation0 [shape = 'u32[]', space=smem, size = 0x4, offset = 0x4, fixed_abs, tag = 'smem constant byte address 0x4 - core index']
  #allocation1 [shape = 'u32[144,128]{1,0:T(1,128)}', space=vmem, size = 0x12000, scoped, tag = 'internal scratch']
  %s0 = inlined_call_operand.hbm [shape: f32[2,1024], index: 0, kind: input, shape index: {}]
  %s1 = inlined_call_operand.hbm [shape: f32[1,1024], index: 1, kind: input, shape index: {}]
  %s2 = inlined_call_operand.hbm [shape: f32[1,1024], index: 2, kind: input, shape index: {}]
  %s3 = inlined_call_operand.hbm [shape: f32[2,1024], index: 3, kind: output, shape index: {}]
  %s4 = sld [smem:[#allocation0]]
  $region34: #{layernorm2d.1} parent=0
    _
  %s6 = ssub.s32 1, %s4
  %s7 = scalar_select 0, %s6, %s4
  $region1: #{layernorm2d.1} parent=0
    #allocation2 [shape = 'u8[8192]{0}', space=vmem, size = 0x2000, scoped, tag = 'input window, operand 0, single buffered']
    #allocation3 [shape = 's32[1]{0}', space=sflag, size = 0x4, scoped, tag = 'scoped memory for layernorm2d.1']
    #allocation4 [shape = 's32[1]{0}', space=sflag, size = 0x4, scoped, tag = 'scoped memory for layernorm2d.1']
    #allocation5 [shape = 'u8[4096]{0}', space=vmem, size = 0x1000, scoped, tag = 'input window, operand 1, single buffered']
    #allocation6 [shape = 's32[1]{0}', space=sflag, size = 0x4, scoped, tag = 'scoped memory for layernorm2d.1']
    #allocation7 [shape = 'u8[4096]{0}', space=vmem, size = 0x1000, scoped, tag = 'input window, operand 2, single buffered']
    #allocation8 [shape = 'u8[8192]{0}', space=vmem, size = 0x2000, scoped, tag = 'output window, operand 0, single buffered']
    %8 = vsyncpa [#allocation3], 0
    %9 = vsyncpa [#allocation6], 0
    %10 = vsyncpa [#allocation4], 0
    // Predicated region
    $region2: #{layernorm2d.1} parent=1 // pred_check
      _
    $region3: #{layernorm2d.1} parent=1 // pred_check_branch
      %12 = sbr.rel (0) target = $region5
    $region4: #{layernorm2d.1} parent=1 // pred_region
      %s14 = ssub.s32 256, 256
      %15 = vsyncadd [#allocation3], %s14
      %s17 = sshll.u32 [#allocation2], 4
      %s18 = int_to_ptr.vmem [resolvable:$true] %s17
      %20 = dma.hbm_to_vmem [thread:$0]  %s0, 256, %s18, [#allocation3]
    $region5: #{layernorm2d.1} parent=1 // pred_fallthru
      _
    // Predicated region
    $region6: #{layernorm2d.1} parent=1 // pred_check
      _
    $region7: #{layernorm2d.1} parent=1 // pred_check_branch
      %22 = sbr.rel (0) target = $region9
    $region8: #{layernorm2d.1} parent=1 // pred_region
      %s24 = ssub.s32 128, 128
      %25 = vsyncadd [#allocation6], %s24
      %s27 = sshll.u32 [#allocation5], 4
      %s28 = int_to_ptr.vmem [resolvable:$true] %s27
      %30 = dma.hbm_to_vmem [thread:$0]  %s1, 128, %s28, [#allocation6]
    $region9: #{layernorm2d.1} parent=1 // pred_fallthru
      _
    // Predicated region
    $region10: #{layernorm2d.1} parent=1 // pred_check
      _
    $region11: #{layernorm2d.1} parent=1 // pred_check_branch
      %32 = sbr.rel (0) target = $region13
    $region12: #{layernorm2d.1} parent=1 // pred_region
      %s34 = ssub.s32 128, 128
      %35 = vsyncadd [#allocation6], %s34
      %s37 = sshll.u32 [#allocation7], 4
      %s38 = int_to_ptr.vmem [resolvable:$true] %s37
      %40 = dma.hbm_to_vmem [thread:$0]  %s2, 128, %s38, [#allocation6]
    $region13: #{layernorm2d.1} parent=1 // pred_fallthru
      _
    // Predicated region
    $region14: #{layernorm2d.1} parent=1 // pred_check
      _
    $region15: #{layernorm2d.1} parent=1 // pred_check_branch
      %42 = sbr.rel (0) target = $region17
    $region16: #{layernorm2d.1} parent=1 // pred_region
      %43 = dma.done [#allocation3], 256
    $region17: #{layernorm2d.1} parent=1 // pred_fallthru
      _
    // Predicated region
    $region18: #{layernorm2d.1} parent=1 // pred_check
      _
    $region19: #{layernorm2d.1} parent=1 // pred_check_branch
      %45 = sbr.rel (0) target = $region21
    $region20: #{layernorm2d.1} parent=1 // pred_region
      %46 = dma.done [#allocation6], 128
    $region21: #{layernorm2d.1} parent=1 // pred_fallthru
      _
    // Predicated region
    $region22: #{layernorm2d.1} parent=1 // pred_check
      _
    $region23: #{layernorm2d.1} parent=1 // pred_check_branch
      %48 = sbr.rel (0) target = $region25
    $region24: #{layernorm2d.1} parent=1 // pred_region
      %49 = dma.done [#allocation6], 128
    $region25: #{layernorm2d.1} parent=1 // pred_fallthru
      _
    %v50 = vld [vmem:[#allocation2] sm:$0xff]
    %v51 = vld [vmem:[#allocation2 + $0x8] sm:$0xff]
    %v54 = vcombine.high %v50, %v50
    %v56 = vunpack.c.l.s4 1983009808
    %v57 = vunpack.c.0.s8 %v56
    %v58 = vlaneseq
    %v59 = vshrl.u32 %v58, 7
    %v60 = vsub.s32 %v57, %v59
    %v61 = vrot.slane %v50, %v60
    %v63 = vunpack.c.l.s4 1983009808
    %v64 = vunpack.c.0.s8 %v63
    %v65 = vlaneseq
    %v66 = vshrl.u32 %v65, 7
    %v67 = vsub.s32 %v64, %v66
    %v68 = vrot.slane %v54, %v67
    %v69 = vcombine.high %v61, %v61
    %v70 = vcombine.high %v68, %v68
    %v71 = vcombine.high %v51, %v51
    %v73 = vunpack.c.l.s4 1983009808
    %v74 = vunpack.c.0.s8 %v73
    %v75 = vlaneseq
    %v76 = vshrl.u32 %v75, 7
    %v77 = vsub.s32 %v74, %v76
    %v78 = vrot.slane %v51, %v77
    %v80 = vunpack.c.l.s4 1983009808
    %v81 = vunpack.c.0.s8 %v80
    %v82 = vlaneseq
    %v83 = vshrl.u32 %v82, 7
    %v84 = vsub.s32 %v81, %v83
    %v85 = vrot.slane %v71, %v84
    %v86 = vcombine.high %v78, %v78
    %v87 = vcombine.high %v85, %v85
    %vm96 = vcmask 1041408
    %v97 = vsel %vm96, %v61, 0.0
    %v98 = vsel %vm96, %v69, 0.0
    %v99 = vadd.f32 %v97, %v98
    %v100 = vsel %vm96, %v68, 0.0
    %v101 = vadd.f32 %v99, %v100
    %v102 = vsel %vm96, %v70, 0.0
    %v103 = vadd.f32 %v101, %v102
    %v104 = vsel %vm96, %v78, 0.0
    %v105 = vadd.f32 %v103, %v104
    %v106 = vsel %vm96, %v86, 0.0
    %v107 = vadd.f32 %v105, %v106
    %v108 = vsel %vm96, %v85, 0.0
    %v109 = vadd.f32 %v107, %v108
    %v110 = vsel %vm96, %v87, 0.0
    %v111 = vadd.f32 %v109, %v110
    %112 = vadd.xlane.f32.xlu0 %v111
    %v113 = vpop.xlane.xlu0 %112
    %v114 = vrcp.pop 1024.0
    %v115 = vmul.f32 %v113, %v114
    %v118 = vunpack.c.l.s4 269488144
    %v119 = vunpack.c.0.s8 %v118
    %v120 = vlaneseq
    %v121 = vshrl.u32 %v120, 7
    %v122 = vsub.s32 %v119, %v121
    %v123 = vrot.slane %v115, %v122
    %v125 = vsub.f32 %v50, %v123
    %v126 = vsub.f32 %v51, %v123
    %v127 = vmul.f32 %v125, %v125
    %v128 = vmul.f32 %v126, %v126
    %v131 = vcombine.high %v127, %v127
    %v133 = vunpack.c.l.s4 1983009808
    %v134 = vunpack.c.0.s8 %v133
    %v135 = vlaneseq
    %v136 = vshrl.u32 %v135, 7
    %v137 = vsub.s32 %v134, %v136
    %v138 = vrot.slane %v127, %v137
    %v140 = vunpack.c.l.s4 1983009808
    %v141 = vunpack.c.0.s8 %v140
    %v142 = vlaneseq
    %v143 = vshrl.u32 %v142, 7
    %v144 = vsub.s32 %v141, %v143
    %v145 = vrot.slane %v131, %v144
    %v146 = vcombine.high %v138, %v138
    %v147 = vcombine.high %v145, %v145
    %v148 = vcombine.high %v128, %v128
    %v150 = vunpack.c.l.s4 1983009808
    %v151 = vunpack.c.0.s8 %v150
    %v152 = vlaneseq
    %v153 = vshrl.u32 %v152, 7
    %v154 = vsub.s32 %v151, %v153
    %v155 = vrot.slane %v128, %v154
    %v157 = vunpack.c.l.s4 1983009808
    %v158 = vunpack.c.0.s8 %v157
    %v159 = vlaneseq
    %v160 = vshrl.u32 %v159, 7
    %v161 = vsub.s32 %v158, %v160
    %v162 = vrot.slane %v148, %v161
    %v163 = vcombine.high %v155, %v155
    %v164 = vcombine.high %v162, %v162
    %v173 = vsel %vm96, %v138, 0.0
    %v174 = vsel %vm96, %v146, 0.0
    %v175 = vadd.f32 %v173, %v174
    %v176 = vsel %vm96, %v145, 0.0
    %v177 = vadd.f32 %v175, %v176
    %v178 = vsel %vm96, %v147, 0.0
    %v179 = vadd.f32 %v177, %v178
    %v180 = vsel %vm96, %v155, 0.0
    %v181 = vadd.f32 %v179, %v180
    %v182 = vsel %vm96, %v163, 0.0
    %v183 = vadd.f32 %v181, %v182
    %v184 = vsel %vm96, %v162, 0.0
    %v185 = vadd.f32 %v183, %v184
    %v186 = vsel %vm96, %v164, 0.0
    %v187 = vadd.f32 %v185, %v186
    %188 = vadd.xlane.f32.xlu0 %v187
    %v189 = vpop.xlane.xlu0 %188
    %v190 = vmul.f32 %v189, %v114
    %v191 = vadd.f32 %v190, 1e-05
    %v192 = vrsqrt.pop %v191
    %v195 = vunpack.c.l.s4 269488144
    %v196 = vunpack.c.0.s8 %v195
    %v197 = vlaneseq
    %v198 = vshrl.u32 %v197, 7
    %v199 = vsub.s32 %v196, %v198
    %v200 = vrot.slane %v192, %v199
    %v202 = vmul.f32 %v125, %v200
    %v203 = vmul.f32 %v126, %v200
    %v204 = vld [vmem:[#allocation5] sm:$0xff]
    %v206 = vlaneseq
    %v207 = vshrl.u32 %v206, 7
    %v208 = vsub.s32 0, %v207
    %v209 = vrot.slane %v204, %v208
    %v210 = vlaneseq
    %v211 = vshrl.u32 %v210, 7
    %v212 = vsub.s32 1, %v211
    %v213 = vrot.slane %v204, %v212
    %v214 = vlaneseq
    %v215 = vshrl.u32 %v214, 7
    %v216 = vsub.s32 2, %v215
    %v217 = vrot.slane %v204, %v216
    %v218 = vlaneseq
    %v219 = vshrl.u32 %v218, 7
    %v220 = vsub.s32 3, %v219
    %v221 = vrot.slane %v204, %v220
    %v222 = vlaneseq
    %v223 = vshrl.u32 %v222, 7
    %v224 = vsub.s32 4, %v223
    %v225 = vrot.slane %v204, %v224
    %v226 = vlaneseq
    %v227 = vshrl.u32 %v226, 7
    %v228 = vsub.s32 5, %v227
    %v229 = vrot.slane %v204, %v228
    %v230 = vlaneseq
    %v231 = vshrl.u32 %v230, 7
    %v232 = vsub.s32 6, %v231
    %v233 = vrot.slane %v204, %v232
    %v234 = vlaneseq
    %v235 = vshrl.u32 %v234, 7
    %v236 = vsub.s32 7, %v235
    %v237 = vrot.slane %v204, %v236
    %v238 = vcombine.low %v209, %v213
    %v239 = vcombine.low %v217, %v221
    %v241 = vunpack.c.l.s4 1983009808
    %v242 = vunpack.c.0.s8 %v241
    %v243 = vlaneseq
    %v244 = vshrl.u32 %v243, 7
    %v245 = vsub.s32 %v242, %v244
    %v246 = vrot.slane %v238, %v245
    %v248 = vunpack.c.l.s4 1983009808
    %v249 = vunpack.c.0.s8 %v248
    %v250 = vlaneseq
    %v251 = vshrl.u32 %v250, 7
    %v252 = vsub.s32 %v249, %v251
    %v253 = vrot.slane %v239, %v252
    %v254 = vcombine.low %v246, %v253
    %v255 = vcombine.low %v225, %v229
    %v256 = vcombine.low %v233, %v237
    %v258 = vunpack.c.l.s4 1983009808
    %v259 = vunpack.c.0.s8 %v258
    %v260 = vlaneseq
    %v261 = vshrl.u32 %v260, 7
    %v262 = vsub.s32 %v259, %v261
    %v263 = vrot.slane %v255, %v262
    %v265 = vunpack.c.l.s4 1983009808
    %v266 = vunpack.c.0.s8 %v265
    %v267 = vlaneseq
    %v268 = vshrl.u32 %v267, 7
    %v269 = vsub.s32 %v266, %v268
    %v270 = vrot.slane %v256, %v269
    %v271 = vcombine.low %v263, %v270
    %v274 = vmul.f32 %v202, %v254
    %v275 = vmul.f32 %v203, %v271
    %v276 = vld [vmem:[#allocation7] sm:$0xff]
    %v278 = vlaneseq
    %v279 = vshrl.u32 %v278, 7
    %v280 = vsub.s32 0, %v279
    %v281 = vrot.slane %v276, %v280
    %v282 = vlaneseq
    %v283 = vshrl.u32 %v282, 7
    %v284 = vsub.s32 1, %v283
    %v285 = vrot.slane %v276, %v284
    %v286 = vlaneseq
    %v287 = vshrl.u32 %v286, 7
    %v288 = vsub.s32 2, %v287
    %v289 = vrot.slane %v276, %v288
    %v290 = vlaneseq
    %v291 = vshrl.u32 %v290, 7
    %v292 = vsub.s32 3, %v291
    %v293 = vrot.slane %v276, %v292
    %v294 = vlaneseq
    %v295 = vshrl.u32 %v294, 7
    %v296 = vsub.s32 4, %v295
    %v297 = vrot.slane %v276, %v296
    %v298 = vlaneseq
    %v299 = vshrl.u32 %v298, 7
    %v300 = vsub.s32 5, %v299
    %v301 = vrot.slane %v276, %v300
    %v302 = vlaneseq
    %v303 = vshrl.u32 %v302, 7
    %v304 = vsub.s32 6, %v303
    %v305 = vrot.slane %v276, %v304
    %v306 = vlaneseq
    %v307 = vshrl.u32 %v306, 7
    %v308 = vsub.s32 7, %v307
    %v309 = vrot.slane %v276, %v308
    %v310 = vcombine.low %v281, %v285
    %v311 = vcombine.low %v289, %v293
    %v313 = vunpack.c.l.s4 1983009808
    %v314 = vunpack.c.0.s8 %v313
    %v315 = vlaneseq
    %v316 = vshrl.u32 %v315, 7
    %v317 = vsub.s32 %v314, %v316
    %v318 = vrot.slane %v310, %v317
    %v320 = vunpack.c.l.s4 1983009808
    %v321 = vunpack.c.0.s8 %v320
    %v322 = vlaneseq
    %v323 = vshrl.u32 %v322, 7
    %v324 = vsub.s32 %v321, %v323
    %v325 = vrot.slane %v311, %v324
    %v326 = vcombine.low %v318, %v325
    %v327 = vcombine.low %v297, %v301
    %v328 = vcombine.low %v305, %v309
    %v330 = vunpack.c.l.s4 1983009808
    %v331 = vunpack.c.0.s8 %v330
    %v332 = vlaneseq
    %v333 = vshrl.u32 %v332, 7
    %v334 = vsub.s32 %v331, %v333
    %v335 = vrot.slane %v327, %v334
    %v337 = vunpack.c.l.s4 1983009808
    %v338 = vunpack.c.0.s8 %v337
    %v339 = vlaneseq
    %v340 = vshrl.u32 %v339, 7
    %v341 = vsub.s32 %v338, %v340
    %v342 = vrot.slane %v328, %v341
    %v343 = vcombine.low %v335, %v342
    %v346 = vadd.f32 %v274, %v326
    %v347 = vadd.f32 %v275, %v343
    %348 = vst [vmem:[#allocation8] sm:$0xff] %v346
    %349 = vst [vmem:[#allocation8 + $0x8] sm:$0xff] %v347
    // Predicated region
    $region26: #{layernorm2d.1} parent=1 // pred_check
      _
    $region27: #{layernorm2d.1} parent=1 // pred_check_branch
      %351 = sbr.rel (0) target = $region29
    $region28: #{layernorm2d.1} parent=1 // pred_region
      %s353 = ssub.s32 256, 256
      %354 = vsyncadd [#allocation4], %s353
      %s356 = sshll.u32 [#allocation8], 4
      %s357 = int_to_ptr.vmem [resolvable:$true] %s356
      %359 = dma.vmem_to_hbm [thread:$0]  %s357, 256, %s3, [#allocation4]
    $region29: #{layernorm2d.1} parent=1 // pred_fallthru
      _
    // Predicated region
    $region30: #{layernorm2d.1} parent=1 // pred_check
      _
    $region31: #{layernorm2d.1} parent=1 // pred_check_branch
      %361 = sbr.rel (0) target = $region33
    $region32: #{layernorm2d.1} parent=1 // pred_region
      %362 = dma.done [#allocation4], 256
    $region33: #{layernorm2d.1} parent=1 // pred_fallthru
      _
    %363 = vsyncpa [#allocation3], 1
    %364 = vsyncpa [#allocation6], 1
    %365 = vsyncpa [#allocation4], 1

</llo_original>
